<compile_context>
chip_gen: v7x
topology: tpu7x:2x2x1
jax: 0.10.0
libtpu: 0.0.40
codegen_flags: <defaults>
</compile_context>

<pallas_src>
import jax
import jax.numpy as jnp
from jax import lax
from jax.experimental import pallas as pl
from jax.experimental.pallas import tpu as pltpu

EPS = 1e-5
LANE = 128
ROW_ALIGN = 16          # bf16 sublane packing along the row (M) dimension
K_ALIGN = 16            # bf16 sublane packing along the contraction (K) dimension


def _round_up(x, m):
    return (x + m - 1) // m * m


# ----------------------------- Pallas kernel ------------------------------- #

def _mm_bias_silu_kernel(x_ref, w_ref, shift_ref, o_ref):
    # x: (TM, Kp) bf16, w: (Kp, Cp) bf16 (BN scale already folded in, f32->bf16),
    # shift: (1, Cp) f32.   o = SiLU(x @ w + shift)
    # Accumulate and run the epilogue in f32; cast only at the final store.
    z = jnp.dot(x_ref[...], w_ref[...], preferred_element_type=jnp.float32)
    z = z + shift_ref[...]
    # SiLU = z * sigmoid(z); the divide rides the EUP via the approx reciprocal.
    sig = pl.reciprocal(1.0 + jnp.exp(-z), approx=True)
    o_ref[...] = (z * sig).astype(o_ref.dtype)


# ------------------------------ Pallas wrapper ------------------------------ #

def mm_bias_silu_pallas(x, w, scale, shift, *, out_dtype=jnp.float32, tm=1024):
    """SiLU(x @ (w * scale) + shift) with M-tiling; BN scale folded into w (f32)."""
    M, K = x.shape
    Kw, Cout = w.shape
    assert Kw == K

    # Channel (lane) padding policy (review #5):
    #   small Cout -> write the true channel count (masked stores but 4-16x less
    #   output HBM writeback and no post-kernel channel slice);
    #   large Cout -> pad to 128 lanes for unmasked, lane-dense stores.
    Cp = Cout if Cout <= 32 else _round_up(Cout, LANE)

    # Contraction padded to the bf16 sublane pack (review #7).
    Kp = _round_up(K, K_ALIGN)

    # Row tile (review #3/#4): as large as possible, but keep >= 2 grid steps
    # whenever M allows so the single "parallel" axis can shard across the two
    # v7x TensorCores (small-M calls shrink TM instead of collapsing the grid).
    TM = min(_round_up(tm, ROW_ALIGN),
             _round_up(max((M + 1) // 2, ROW_ALIGN), ROW_ALIGN))
    Mp = _round_up(M, TM)

    # Fold BN scale into the weights in f32 *before* the bf16 cast (review #6).
    wf = w.astype(jnp.float32) * scale.astype(jnp.float32)[None, :]
    sh = shift.reshape(1, Cout).astype(jnp.float32)

    if Cp != Cout:
        wf = jnp.pad(wf, ((0, 0), (0, Cp - Cout)))
        sh = jnp.pad(sh, ((0, 0), (0, Cp - Cout)))
    if Kp != K:
        wf = jnp.pad(wf, ((0, Kp - K), (0, 0)))
        x = jnp.pad(x, ((0, 0), (0, Kp - K)))
    if Mp != M:
        x = jnp.pad(x, ((0, Mp - M), (0, 0)))

    xb = x.astype(jnp.bfloat16)
    wb = wf.astype(jnp.bfloat16)

    out_bytes = jnp.dtype(out_dtype).itemsize
    # Double-buffered x/out tiles + resident weights + shift, with headroom.
    vmem_need = 2 * (TM * Kp * 2 + TM * Cp * out_bytes) + Kp * Cp * 2 + Cp * 4
    vmem_limit = int(min(max(4 * vmem_need, 32 * 1024 * 1024), 48 * 1024 * 1024))

    cost = pl.CostEstimate(
        flops=2 * Mp * Kp * Cp,
        transcendentals=Mp * Cp,
        bytes_accessed=Mp * Kp * 2 + Kp * Cp * 2 + Cp * 4 + Mp * Cp * out_bytes,
    )

    out = pl.pallas_call(
        _mm_bias_silu_kernel,
        out_shape=jax.ShapeDtypeStruct((Mp, Cp), out_dtype),
        grid=(Mp // TM,),
        in_specs=[
            pl.BlockSpec((TM, Kp), lambda i: (i, 0)),   # pipelined row tiles
            pl.BlockSpec((Kp, Cp), lambda i: (0, 0)),   # weights resident
            pl.BlockSpec((1, Cp), lambda i: (0, 0)),    # BN shift resident
        ],
        out_specs=pl.BlockSpec((TM, Cp), lambda i: (i, 0)),
        compiler_params=pltpu.CompilerParams(
            dimension_semantics=("parallel",),
            vmem_limit_bytes=vmem_limit,
        ),
        cost_estimate=cost,
    )(xb, wb, sh)

    if Mp != M or Cp != Cout:
        out = out[:M, :Cout]
    return out


# -------------------------------- JAX glue ---------------------------------- #

def extract_patches(x_nhwc, kh, kw, stride, pad):
    """(N,H,W,C) -> (N,OH,OW,kh*kw,C) patches, row-major over (kh,kw)."""
    # TODO(synk): review #1 - move this gather into the kernel (tap grid axis).
    N, H, W, C = x_nhwc.shape
    xp = jnp.pad(x_nhwc, ((0, 0), (pad, pad), (pad, pad), (0, 0)))
    OH = (H + 2 * pad - kh) // stride + 1
    OW = (W + 2 * pad - kw) // stride + 1
    pats = []
    for i in range(kh):
        for j in range(kw):
            sl = lax.slice(
                xp,
                (0, i, j, 0),
                (N, i + stride * (OH - 1) + 1, j + stride * (OW - 1) + 1, C),
                (1, stride, stride, 1),
            )
            pats.append(sl)
    return jnp.stack(pats, axis=3)  # (N, OH, OW, kh*kw, C)


def focus_pointsize_forward(x_nchw, p):
    """x_nchw: (N, c1, H, W) float32 -> (N, 2*c2, H//4, W//4) float32."""
    N, c1, H, W = x_nchw.shape
    c2 = p["w_pw"].shape[0]

    # NHWC + bf16 activations (halves the HBM traffic of the patch tensors).
    x = jnp.transpose(x_nchw, (0, 2, 3, 1)).astype(jnp.bfloat16)

    # --- conv1: depthwise 6x6 s2 p2 folded into pointwise 1x1 + BN + SiLU ---- #
    pat1 = extract_patches(x, 6, 6, 2, 2)                  # (N, OH1, OW1, 36, c1)
    _, OH1, OW1, KK1, _ = pat1.shape
    pat1f = pat1.reshape(N * OH1 * OW1, KK1 * c1)          # (M1, 36*c1)

    w_dw_flat = jnp.transpose(p["w_dw"][:, 0, :, :], (1, 2, 0)).reshape(KK1, c1)  # (36, c1)
    w_pw_mat = p["w_pw"][:, :, 0, 0].T                                            # (c1, c2)
    w1_fused = (w_dw_flat[:, :, None] * w_pw_mat[None, :, :]).reshape(KK1 * c1, c2)
    b1_fused = p["b_dw"] @ w_pw_mat + p["b_pw"]                                    # (c2,)

    scale1 = p["g1"] / jnp.sqrt(p["v1"] + EPS)
    shift1 = p["be1"] - p["m1"] * scale1 + b1_fused * scale1

    # Stage-1 output straight to bf16 (review #2): its only consumer is the
    # bf16 stage-2 patch build, so no separate f32->bf16 pass, half the writeback.
    y1 = mm_bias_silu_pallas(pat1f, w1_fused, scale1, shift1,
                             out_dtype=jnp.bfloat16)        # (M1, c2) bf16
    y1 = y1.reshape(N, OH1, OW1, c2)

    # --- conv2: 3x3 s2 p1 + BN + SiLU (im2col matmul, fused affine) ---------- #
    pat2 = extract_patches(y1, 3, 3, 2, 1)                  # (N, OH2, OW2, 9, c2)
    _, OH2, OW2, KK2, _ = pat2.shape
    pat2f = pat2.reshape(N * OH2 * OW2, KK2 * c2)
    w2_mat = jnp.transpose(p["w2"], (2, 3, 1, 0)).reshape(KK2 * c2, 2 * c2)
    scale2 = p["g2"] / jnp.sqrt(p["v2"] + EPS)
    shift2 = p["be2"] - p["m2"] * scale2 + p["b2"] * scale2

    # Final stage keeps an f32 output (it is the module's result dtype).
    y2 = mm_bias_silu_pallas(pat2f, w2_mat, scale2, shift2,
                             out_dtype=jnp.float32)          # (M2, 2*c2)
    y2 = y2.reshape(N, OH2, OW2, 2 * c2)

    # TODO(synk): drop this relayout if the consumer accepts NHWC (review #12).
    return jnp.transpose(y2, (0, 3, 1, 2))  # back to NCHW


# ----------------------------- pure-JAX reference --------------------------- #

def reference_forward(x, p):
    dn = ("NCHW", "OIHW", "NCHW")
    c1 = p["w_dw"].shape[0]

    y = lax.conv_general_dilated(x, p["w_dw"], (2, 2), ((2, 2), (2, 2)),
                                 dimension_numbers=dn, feature_group_count=c1)
    y = y + p["b_dw"][None, :, None, None]

    y = lax.conv_general_dilated(y, p["w_pw"], (1, 1), ((0, 0), (0, 0)),
                                 dimension_numbers=dn)
    y = y + p["b_pw"][None, :, None, None]
    y = (y - p["m1"][None, :, None, None]) / jnp.sqrt(p["v1"][None, :, None, None] + EPS)
    y = y * p["g1"][None, :, None, None] + p["be1"][None, :, None, None]
    y = y * jax.nn.sigmoid(y)

    y = lax.conv_general_dilated(y, p["w2"], (2, 2), ((1, 1), (1, 1)),
                                 dimension_numbers=dn)
    y = y + p["b2"][None, :, None, None]
    y = (y - p["m2"][None, :, None, None]) / jnp.sqrt(p["v2"][None, :, None, None] + EPS)
    y = y * p["g2"][None, :, None, None] + p["be2"][None, :, None, None]
    y = y * jax.nn.sigmoid(y)
    return y


# ---------------------------------- main ------------------------------------ #

if __name__ == "__main__":
    N, c1, H, W = 2, 4, 16, 16
    c2 = 8

    key = jax.random.PRNGKey(0)
    ks = jax.random.split(key, 16)

    params = {
        # conv1: depthwise 6x6 (groups=c1) + pointwise 1x1 + BN(c2)
        "w_dw": 0.1 * jax.random.normal(ks[0], (c1, 1, 6, 6), jnp.float32),
        "b_dw": 0.1 * jax.random.normal(ks[1], (c1,), jnp.float32),
        "w_pw": 0.1 * jax.random.normal(ks[2], (c2, c1, 1, 1), jnp.float32),
        "b_pw": 0.1 * jax.random.normal(ks[3], (c2,), jnp.float32),
        "g1": 1.0 + 0.1 * jax.random.normal(ks[4], (c2,), jnp.float32),
        "be1": 0.1 * jax.random.normal(ks[5], (c2,), jnp.float32),
        "m1": 0.1 * jax.random.normal(ks[6], (c2,), jnp.float32),
        "v1": jnp.abs(1.0 + 0.1 * jax.random.normal(ks[7], (c2,), jnp.float32)),
        # conv2: 3x3 s2 p1 + BN(2*c2)
        "w2": 0.1 * jax.random.normal(ks[8], (2 * c2, c2, 3, 3), jnp.float32),
        "b2": 0.1 * jax.random.normal(ks[9], (2 * c2,), jnp.float32),
        "g2": 1.0 + 0.1 * jax.random.normal(ks[10], (2 * c2,), jnp.float32),
        "be2": 0.1 * jax.random.normal(ks[11], (2 * c2,), jnp.float32),
        "m2": 0.1 * jax.random.normal(ks[12], (2 * c2,), jnp.float32),
        "v2": jnp.abs(1.0 + 0.1 * jax.random.normal(ks[13], (2 * c2,), jnp.float32)),
    }

    x = jax.random.normal(ks[14], (N, c1, H, W), jnp.float32)

    out = jax.jit(focus_pointsize_forward)(x, params)
    out = jax.block_until_ready(out)

    ref = reference_forward(x, params)
    assert out.shape == (N, 2 * c2, H // 4, W // 4), out.shape
    # Tolerance relaxed vs the f32 baseline: bf16 MXU inputs + approx reciprocal.
    assert jnp.allclose(out, ref, atol=2e-2, rtol=2e-2), float(jnp.max(jnp.abs(out - ref)))

    print("KERNEL_OK")
</pallas_src>

<mosaic_0001>
module attributes {stable_mosaic.version = 11 : i64} {
  func.func @_mm_bias_silu_kernel(%arg0: i32, %arg1: memref<64x144xbf16, #tpu.memory_space<vmem>>, %arg2: memref<144x8xbf16, #tpu.memory_space<vmem>>, %arg3: memref<1x8xf32, #tpu.memory_space<vmem>>, %arg4: memref<64x8xbf16, #tpu.memory_space<vmem>>) attributes {dimension_semantics = [#tpu.dimension_semantics<parallel>], iteration_bounds = array<i64: 2>, scalar_prefetch = 0 : i64, scratch_operands = 0 : i64, tpu.core_type = #tpu.core_type<tc>, window_params = [{transform_indices = @transform_0, window_bounds = array<i64: 64, 144>}, {pipeline_mode = #tpu.pipeline_mode<synchronous>, transform_indices = @transform_1, window_bounds = array<i64: 144, 8>}, {pipeline_mode = #tpu.pipeline_mode<synchronous>, transform_indices = @transform_2, window_bounds = array<i64: 1, 8>}, {transform_indices = @transform_3, window_bounds = array<i64: 64, 8>}]} {
    %c0 = arith.constant 0 : index
    %c0_0 = arith.constant 0 : index
    %0 = vector.load %arg1[%c0, %c0_0] : memref<64x144xbf16, #tpu.memory_space<vmem>>, vector<64x144xbf16>
    %c0_1 = arith.constant 0 : index
    %c0_2 = arith.constant 0 : index
    %1 = vector.load %arg2[%c0_1, %c0_2] : memref<144x8xbf16, #tpu.memory_space<vmem>>, vector<144x8xbf16>
    %cst = arith.constant dense<0.000000e+00> : vector<64x8xf32>
    %2 = tpu.matmul %0, %1, %cst {dimension_numbers = #tpu.dot_dimension_numbers<[1], [0], [0], [1], [0, 0, 1, 1], [], []>} : vector<64x144xbf16>, vector<144x8xbf16>, vector<64x8xf32> -> vector<64x8xf32>
    %c0_3 = arith.constant 0 : index
    %c0_4 = arith.constant 0 : index
    %3 = vector.load %arg3[%c0_3, %c0_4] : memref<1x8xf32, #tpu.memory_space<vmem>>, vector<1x8xf32>
    %4 = vector.broadcast %3 : vector<1x8xf32> to vector<64x8xf32>
    %5 = arith.addf %2, %4 : vector<64x8xf32>
    %cst_5 = arith.constant 0.000000e+00 : f32
    %6 = vector.broadcast %cst_5 : f32 to vector<64x8xf32>
    %7 = arith.subf %6, %5 : vector<64x8xf32>
    %8 = math.exp %7 : vector<64x8xf32>
    %cst_6 = arith.constant 1.000000e+00 : f32
    %9 = vector.broadcast %cst_6 : f32 to vector<64x8xf32>
    %10 = arith.addf %9, %8 : vector<64x8xf32>
    %11 = tpu.reciprocal %10 {approx = true} : vector<64x8xf32> -> vector<64x8xf32>
    %12 = arith.mulf %5, %11 : vector<64x8xf32>
    %13 = arith.truncf %12 : vector<64x8xf32> to vector<64x8xbf16>
    %c0_7 = arith.constant 0 : index
    %c0_8 = arith.constant 0 : index
    %14 = vector.load %arg4[%c0_7, %c0_8] : memref<64x8xbf16, #tpu.memory_space<vmem>>, vector<64x8xbf16>
    tpu.vector_store %arg4[%c0_7, %c0_8], %13 {strides = array<i32>} : memref<64x8xbf16, #tpu.memory_space<vmem>>, vector<64x8xbf16>,
    return
  }
  func.func @transform_0(%arg0: i32) -> (i32, i32) {
    %c0_i32 = arith.constant 0 : i32
    %c0_i32_0 = arith.constant 0 : i32
    return %arg0, %c0_i32 : i32, i32
  }
  func.func @transform_1(%arg0: i32) -> (i32, i32) {
    %c0_i32 = arith.constant 0 : i32
    %c0_i32_0 = arith.constant 0 : i32
    %c0_i32_1 = arith.constant 0 : i32
    return %c0_i32, %c0_i32_0 : i32, i32
  }
  func.func @transform_2(%arg0: i32) -> (i32, i32) {
    %c0_i32 = arith.constant 0 : i32
    %c0_i32_0 = arith.constant 0 : i32
    %c0_i32_1 = arith.constant 0 : i32
    return %c0_i32, %c0_i32_0 : i32, i32
  }
  func.func @transform_3(%arg0: i32) -> (i32, i32) {
    %c0_i32 = arith.constant 0 : i32
    %c0_i32_0 = arith.constant 0 : i32
    return %arg0, %c0_i32 : i32, i32
  }
}

module attributes {stable_mosaic.version = 11 : i64} {
  func.func @_mm_bias_silu_kernel(%arg0: i32, %arg1: memref<16x80xbf16, #tpu.memory_space<vmem>>, %arg2: memref<80x16xbf16, #tpu.memory_space<vmem>>, %arg3: memref<1x16xf32, #tpu.memory_space<vmem>>, %arg4: memref<16x16xf32, #tpu.memory_space<vmem>>) attributes {dimension_semantics = [#tpu.dimension_semantics<parallel>], iteration_bounds = array<i64: 2>, scalar_prefetch = 0 : i64, scratch_operands = 0 : i64, tpu.core_type = #tpu.core_type<tc>, window_params = [{transform_indices = @transform_0, window_bounds = array<i64: 16, 80>}, {pipeline_mode = #tpu.pipeline_mode<synchronous>, transform_indices = @transform_1, window_bounds = array<i64: 80, 16>}, {pipeline_mode = #tpu.pipeline_mode<synchronous>, transform_indices = @transform_2, window_bounds = array<i64: 1, 16>}, {transform_indices = @transform_3, window_bounds = array<i64: 16, 16>}]} {
    %c0 = arith.constant 0 : index
    %c0_0 = arith.constant 0 : index
    %0 = vector.load %arg1[%c0, %c0_0] : memref<16x80xbf16, #tpu.memory_space<vmem>>, vector<16x80xbf16>
    %c0_1 = arith.constant 0 : index
    %c0_2 = arith.constant 0 : index
    %1 = vector.load %arg2[%c0_1, %c0_2] : memref<80x16xbf16, #tpu.memory_space<vmem>>, vector<80x16xbf16>
    %cst = arith.constant dense<0.000000e+00> : vector<16x16xf32>
    %2 = tpu.matmul %0, %1, %cst {dimension_numbers = #tpu.dot_dimension_numbers<[1], [0], [0], [1], [0, 0, 1, 1], [], []>} : vector<16x80xbf16>, vector<80x16xbf16>, vector<16x16xf32> -> vector<16x16xf32>
    %c0_3 = arith.constant 0 : index
    %c0_4 = arith.constant 0 : index
    %3 = vector.load %arg3[%c0_3, %c0_4] : memref<1x16xf32, #tpu.memory_space<vmem>>, vector<1x16xf32>
    %4 = vector.broadcast %3 : vector<1x16xf32> to vector<16x16xf32>
    %5 = arith.addf %2, %4 : vector<16x16xf32>
    %cst_5 = arith.constant 0.000000e+00 : f32
    %6 = vector.broadcast %cst_5 : f32 to vector<16x16xf32>
    %7 = arith.subf %6, %5 : vector<16x16xf32>
    %8 = math.exp %7 : vector<16x16xf32>
    %cst_6 = arith.constant 1.000000e+00 : f32
    %9 = vector.broadcast %cst_6 : f32 to vector<16x16xf32>
    %10 = arith.addf %9, %8 : vector<16x16xf32>
    %11 = tpu.reciprocal %10 {approx = true} : vector<16x16xf32> -> vector<16x16xf32>
    %12 = arith.mulf %5, %11 : vector<16x16xf32>
    %c0_7 = arith.constant 0 : index
    %c0_8 = arith.constant 0 : index
    %13 = vector.load %arg4[%c0_7, %c0_8] : memref<16x16xf32, #tpu.memory_space<vmem>>, vector<16x16xf32>
    tpu.vector_store %arg4[%c0_7, %c0_8], %12 {strides = array<i32>} : memref<16x16xf32, #tpu.memory_space<vmem>>, vector<16x16xf32>,
    return
  }
  func.func @transform_0(%arg0: i32) -> (i32, i32) {
    %c0_i32 = arith.constant 0 : i32
    %c0_i32_0 = arith.constant 0 : i32
    return %arg0, %c0_i32 : i32, i32
  }
  func.func @transform_1(%arg0: i32) -> (i32, i32) {
    %c0_i32 = arith.constant 0 : i32
    %c0_i32_0 = arith.constant 0 : i32
    %c0_i32_1 = arith.constant 0 : i32
    return %c0_i32, %c0_i32_0 : i32, i32
  }
  func.func @transform_2(%arg0: i32) -> (i32, i32) {
    %c0_i32 = arith.constant 0 : i32
    %c0_i32_0 = arith.constant 0 : i32
    %c0_i32_1 = arith.constant 0 : i32
    return %c0_i32, %c0_i32_0 : i32, i32
  }
  func.func @transform_3(%arg0: i32) -> (i32, i32) {
    %c0_i32 = arith.constant 0 : i32
    %c0_i32_0 = arith.constant 0 : i32
    return %arg0, %c0_i32 : i32, i32
  }
}

</mosaic_0001>

<llo_original>
// kernel: focus_pointsize_forward.2
$region0: #{focus_pointsize_forward.2}
  #allocation0 [shape = 'u32[]', space=smem, size = 0x4, offset = 0x4, fixed_abs, tag = 'smem constant byte address 0x4 - core index']
  #allocation1 [shape = 'u32[144,128]{1,0:T(1,128)}', space=vmem, size = 0x12000, scoped, tag = 'internal scratch']
  %s0 = inlined_call_operand.vmem [shape: bf16[128,144], index: 0, kind: input, shape index: {}]
  %s1 = inlined_call_operand.vmem [shape: bf16[144,8], index: 1, kind: input, shape index: {}]
  %s2 = inlined_call_operand.vmem [shape: f32[1,8], index: 2, kind: input, shape index: {}]
  %s3 = inlined_call_operand.vmem [shape: bf16[128,8], index: 3, kind: output, shape index: {}]
  %s4 = sld [smem:[#allocation0]]
  $region45: #{focus_pointsize_forward.2} parent=0
    _
  %s6 = ssub.s32 1, %s4
  %s7 = scalar_select 0, %s6, %s4
  loop: start=0, step=1, limit=4
  $region2: #{focus_pointsize_forward.2} parent=0 // loop_pre_header
    _
  $region3: #{focus_pointsize_forward.2} parent=0 // loop_header
    %s9 = sphi 0, %s13
    %p10 = scmp.ge.s32.totalorder %s9, 4
    %s19 = sphi 0, %s21
    %s22 = sphi 0, %s19
    %s23 = sphi 0, %s22
    %s39 = sphi 0, %s23
    %s43 = sphi 0, %s43
    %s45 = sphi 0, %s43
    %s46 = sphi 0, %s45
    %s60 = sphi 0, %s46
    %s64 = sphi 0, %s64
    %s66 = sphi 0, %s64
    %s67 = sphi 0, %s66
    %s81 = sphi 0, %s67
    %s87 = sphi 0, %s89
    %s90 = sphi 0, %s87
    %s91 = sphi 0, %s90
    %s107 = sphi 0, %s91
  $region4: #{focus_pointsize_forward.2} parent=0 // loop_header_branch
    %12 = sbr.rel (%p10) target = $region8
  $region5: #{focus_pointsize_forward.2} parent=0 // loop_body
    %s14 = ssub.s32 %s9, 1
    %s15 = ssub.s32 %s9, 2
    %s16 = sadd.s32 %s9, 1
    %s17 = ssub.s32 %s9, %s16
    %p18 = scmp.eq.s32.totalorder %s17, 0
    %s20 = sadd.s32 %s19, 1
    %s21 = scalar_select %p18, %s19, %s20
    %p24 = pneg %p18
    %p25 = scmp.eq.s32.totalorder %s9, 1
    %p26 = por %p24, %p25
    %p27 = scmp.ne.s32.totalorder %s19, %s22
    %p28 = scmp.eq.s32.totalorder %s9, 0
    %p29 = por %p27, %p28
    %p30 = scmp.ne.s32.totalorder %s19, %s22
    %p31 = scmp.eq.s32.totalorder %s14, 1
    %p32 = por %p30, %p31
    %p33 = scmp.ne.s32.totalorder %s22, %s23
    %p34 = scmp.eq.s32.totalorder %s14, 0
    %p35 = por %p33, %p34
    %p36 = scmp.ne.s32.totalorder %s22, %s23
    %p37 = scmp.eq.s32.totalorder %s15, 1
    %p38 = por %p36, %p37
    %p40 = scmp.ne.s32.totalorder %s23, %s39
    %p41 = scmp.eq.s32.totalorder %s15, 0
    %p42 = por %p40, %p41
    %s44 = sadd.s32 %s43, 1
    %p47 = scmp.eq.s32.totalorder %s9, 1
    %p48 = scmp.ne.s32.totalorder %s43, %s45
    %p49 = scmp.eq.s32.totalorder %s9, 0
    %p50 = por %p48, %p49
    %p51 = scmp.ne.s32.totalorder %s43, %s45
    %p52 = scmp.eq.s32.totalorder %s14, 1
    %p53 = por %p51, %p52
    %p54 = scmp.ne.s32.totalorder %s45, %s46
    %p55 = scmp.eq.s32.totalorder %s14, 0
    %p56 = por %p54, %p55
    %p57 = scmp.ne.s32.totalorder %s45, %s46
    %p58 = scmp.eq.s32.totalorder %s15, 1
    %p59 = por %p57, %p58
    %p61 = scmp.ne.s32.totalorder %s46, %s60
    %p62 = scmp.eq.s32.totalorder %s15, 0
    %p63 = por %p61, %p62
    %s65 = sadd.s32 %s64, 1
    %p68 = scmp.eq.s32.totalorder %s9, 1
    %p69 = scmp.ne.s32.totalorder %s64, %s66
    %p70 = scmp.eq.s32.totalorder %s9, 0
    %p71 = por %p69, %p70
    %p72 = scmp.ne.s32.totalorder %s64, %s66
    %p73 = scmp.eq.s32.totalorder %s14, 1
    %p74 = por %p72, %p73
    %p75 = scmp.ne.s32.totalorder %s66, %s67
    %p76 = scmp.eq.s32.totalorder %s14, 0
    %p77 = por %p75, %p76
    %p78 = scmp.ne.s32.totalorder %s66, %s67
    %p79 = scmp.eq.s32.totalorder %s15, 1
    %p80 = por %p78, %p79
    %p82 = scmp.ne.s32.totalorder %s67, %s81
    %p83 = scmp.eq.s32.totalorder %s15, 0
    %p84 = por %p82, %p83
    %s85 = ssub.s32 %s9, %s16
    %p86 = scmp.eq.s32.totalorder %s85, 0
    %s88 = sadd.s32 %s87, 1
    %s89 = scalar_select %p86, %s87, %s88
    %p92 = pneg %p86
    %p93 = scmp.eq.s32.totalorder %s9, 1
    %p94 = por %p92, %p93
    %p95 = scmp.ne.s32.totalorder %s87, %s90
    %p96 = scmp.eq.s32.totalorder %s9, 0
    %p97 = por %p95, %p96
    %p98 = scmp.ne.s32.totalorder %s87, %s90
    %p99 = scmp.eq.s32.totalorder %s14, 1
    %p100 = por %p98, %p99
    %p101 = scmp.ne.s32.totalorder %s90, %s91
    %p102 = scmp.eq.s32.totalorder %s14, 0
    %p103 = por %p101, %p102
    %p104 = scmp.ne.s32.totalorder %s90, %s91
    %p105 = scmp.eq.s32.totalorder %s15, 1
    %p106 = por %p104, %p105
    %p108 = scmp.ne.s32.totalorder %s91, %s107
    %p109 = scmp.eq.s32.totalorder %s15, 0
    %p110 = por %p108, %p109
    %p111 = scmp.le.s32.totalorder 1, %s9
    %p112 = scmp.lt.s32.totalorder %s9, 3
    %p113 = pnand %p111, %p112
    %p114 = pneg %p113
    // Predicated region
    $region9: #{focus_pointsize_forward.2} parent=5 // pred_check
      _
    $region10: #{focus_pointsize_forward.2} parent=5 // pred_check_branch
      %116 = sbr.rel (%p113) target = $region12
    $region11: #{focus_pointsize_forward.2} parent=5 // pred_region
      %s117 = ssub.s32 %s9, 1
      // Predicated region
      $region13: #{focus_pointsize_forward.2} parent=11 // pred_check
        %p118 = pneg %p56
      $region14: #{focus_pointsize_forward.2} parent=11 // pred_check_branch
        %120 = sbr.rel (%p118) target = $region16
      $region15: #{focus_pointsize_forward.2} parent=11 // pred_region
        _
      $region16: #{focus_pointsize_forward.2} parent=11 // pred_fallthru
        _
      // Predicated region
      $region17: #{focus_pointsize_forward.2} parent=11 // pred_check
        %p121 = pneg %p77
      $region18: #{focus_pointsize_forward.2} parent=11 // pred_check_branch
        %123 = sbr.rel (%p121) target = $region20
      $region19: #{focus_pointsize_forward.2} parent=11 // pred_region
        _
      $region20: #{focus_pointsize_forward.2} parent=11 // pred_fallthru
        _
    $region12: #{focus_pointsize_forward.2} parent=5 // pred_fallthru
      _
    %p124 = scmp.lt.s32.totalorder %s9, 2
    // Predicated region
    $region21: #{focus_pointsize_forward.2} parent=5 // pred_check
      %p125 = pneg %p124
    $region22: #{focus_pointsize_forward.2} parent=5 // pred_check_branch
      %127 = sbr.rel (%p125) target = $region24
    $region23: #{focus_pointsize_forward.2} parent=5 // pred_region
      // Predicated region
      $region25: #{focus_pointsize_forward.2} parent=23 // pred_check
        %p128 = pneg %p29
      $region26: #{focus_pointsize_forward.2} parent=23 // pred_check_branch
        %130 = sbr.rel (%p128) target = $region28
      $region27: #{focus_pointsize_forward.2} parent=23 // pred_region
        %s131 = smul.u32 8, %s9
        %p132 = scmp.lt.s32.totalorder %s131, 15
        %s133 = scalar_select %p132, %s131, 15
        %s134 = smul.addr %s133, 2
        %s135 = smul.addr %s134, 4
        %s136 = scalar_lea.vmem %s0, %s135
        %s137 = smul.u32 8, %s9
      $region28: #{focus_pointsize_forward.2} parent=23 // pred_fallthru
        _
    $region24: #{focus_pointsize_forward.2} parent=5 // pred_fallthru
      _
    %p138 = scmp.le.s32.totalorder 1, %s9
    %p139 = scmp.lt.s32.totalorder %s9, 3
    %p140 = pnand %p138, %p139
    %p141 = pneg %p140
    // Predicated region
    $region29: #{focus_pointsize_forward.2} parent=5 // pred_check
      _
    $region30: #{focus_pointsize_forward.2} parent=5 // pred_check_branch
      %143 = sbr.rel (%p140) target = $region32
    $region31: #{focus_pointsize_forward.2} parent=5 // pred_region
      %s144 = ssub.s32 %s9, 1
      %s145 = smul.u32 8, %s14
      %p146 = scmp.lt.s32.totalorder %s145, 15
      %s147 = scalar_select %p146, %s145, 15
      %s148 = smul.addr %s147, 2
      %s149 = smul.addr %s148, 4
      %s150 = scalar_lea.vmem %s0, %s149
      %p151 = pneg %p35
      %p152 = pneg %p32
      %p153 = pneg %p56
      %p154 = pneg %p53
      %p155 = pneg %p77
      %p156 = pneg %p74
      %p157 = pneg %p103
      %p158 = pneg %p100
      %s159 = smul.u32 8, %s14
      %p160 = scmp.lt.s32.totalorder %s159, 15
      %s161 = scalar_select %p160, %s159, 15
      %s162 = smul.addr %s161, 4
      %s163 = scalar_lea.vmem %s3, %s162
      %s164 = smul.u32 8, %s14
      %p165 = scmp.lt.s32.totalorder %s164, 15
      %s166 = scalar_select %p165, %s164, 15
      %s167 = smul.addr %s166, 2
      %s168 = smul.addr %s167, 4
      %s169 = scalar_lea.vmem %s0, %s168
      %s170 = smul.u32 8, %s14
      %s171 = smul.u32 8, %s14
      %p172 = scmp.lt.s32.totalorder %s171, 15
      %s173 = scalar_select %p172, %s171, 15
      %s174 = smul.addr %s173, 4
      %s175 = scalar_lea.vmem %s3, %s174
      %s176 = smul.u32 8, %s14
      %v178 = vld [vmem:[%s169] sm:$0xff]
      %v179 = vld [vmem:[%s169 + $0x8] sm:$0xff]
      %v180 = vld [vmem:[%s169 + $0x10] sm:$0xff]
      %v181 = vld [vmem:[%s169 + $0x18] sm:$0xff]
      %v182 = vld [vmem:[%s169 + $0x20] sm:$0xff]
      %v183 = vld [vmem:[%s169 + $0x28] sm:$0xff]
      %v184 = vld [vmem:[%s169 + $0x30] sm:$0xff]
      %v185 = vld [vmem:[%s169 + $0x38] sm:$0xff]
      %v186 = vld [vmem:[%s1] sm:$0xf]
      %v187 = vld [vmem:[%s1 + $0x4] sm:$0xf]
      %v188 = vld [vmem:[%s1 + $0x8] sm:$0xf]
      %v189 = vld [vmem:[%s1 + $0xc] sm:$0xf]
      %v190 = vld [vmem:[%s1 + $0x10] sm:$0xf]
      %v191 = vld [vmem:[%s1 + $0x14] sm:$0xf]
      %v192 = vld [vmem:[%s1 + $0x18] sm:$0xf]
      %v193 = vld [vmem:[%s1 + $0x1c] sm:$0xf]
      %v194 = vld [vmem:[%s1 + $0x20] sm:$0xf]
      %v195 = vld [vmem:[%s1 + $0x24] sm:$0xf]
      %v196 = vld [vmem:[%s1 + $0x28] sm:$0xf]
      %v197 = vld [vmem:[%s1 + $0x2c] sm:$0xf]
      %v198 = vld [vmem:[%s1 + $0x30] sm:$0xf]
      %v199 = vld [vmem:[%s1 + $0x34] sm:$0xf]
      %v200 = vld [vmem:[%s1 + $0x38] sm:$0xf]
      %v201 = vld [vmem:[%s1 + $0x3c] sm:$0xf]
      %v202 = vld [vmem:[%s1 + $0x40] sm:$0xf]
      %v203 = vld [vmem:[%s1 + $0x44] sm:$0xf]
      %v204 = vld [vmem:[%s2] sm:$0x1]
      %v206 = vlaneseq
      %v207 = vshrl.u32 %v206, 7
      %v208 = vsub.s32 0, %v207
      %v209 = vrot.slane %v204, %v208
      %v219 = vunpack.c.l.b16 %v178
      %v220 = vunpack.c.h.b16 %v178
      %v221 = vunpack.c.l.b16 %v179
      %v222 = vunpack.c.h.b16 %v179
      %v223 = vunpack.c.l.b16 %v180
      %v224 = vunpack.c.h.b16 %v180
      %v225 = vunpack.c.l.b16 %v181
      %v226 = vunpack.c.h.b16 %v181
      %v227 = vunpack.c.l.b16 %v182
      %v228 = vunpack.c.h.b16 %v182
      %v229 = vunpack.c.l.b16 %v183
      %v230 = vunpack.c.h.b16 %v183
      %v231 = vunpack.c.l.b16 %v184
      %v232 = vunpack.c.h.b16 %v184
      %v233 = vunpack.c.l.b16 %v185
      %v234 = vunpack.c.h.b16 %v185
      %v235 = vpack.c.b16 %v221, %v219
      %v236 = vpack.c.b16 %v222, %v220
      %v237 = vpack.c.b16 %v225, %v223
      %v238 = vpack.c.b16 %v226, %v224
      %v239 = vpack.c.b16 %v229, %v227
      %v240 = vpack.c.b16 %v230, %v228
      %v241 = vpack.c.b16 %v233, %v231
      %v242 = vpack.c.b16 %v234, %v232
      %v265 = vunpack.c.l.b16 %v186
      %v266 = vunpack.c.l.b16 %v187
      %v267 = vunpack.c.l.b16 %v188
      %v268 = vunpack.c.l.b16 %v189
      %v269 = vunpack.c.l.b16 %v190
      %v270 = vunpack.c.l.b16 %v191
      %v271 = vunpack.c.l.b16 %v192
      %v272 = vunpack.c.l.b16 %v193
      %v273 = vunpack.c.l.b16 %v194
      %v274 = vunpack.c.l.b16 %v195
      %v275 = vunpack.c.l.b16 %v196
      %v276 = vunpack.c.l.b16 %v197
      %v277 = vunpack.c.l.b16 %v198
      %v278 = vunpack.c.l.b16 %v199
      %v279 = vunpack.c.l.b16 %v200
      %v280 = vunpack.c.l.b16 %v201
      %v281 = vunpack.c.l.b16 %v202
      %v282 = vunpack.c.l.b16 %v203
      %v283 = vpack.c.b16 %v266, %v265
      %v284 = vpack.c.b16 %v268, %v267
      %v285 = vpack.c.b16 %v270, %v269
      %v286 = vpack.c.b16 %v272, %v271
      %v287 = vpack.c.b16 %v274, %v273
      %v288 = vpack.c.b16 %v276, %v275
      %v289 = vpack.c.b16 %v278, %v277
      %v290 = vpack.c.b16 %v280, %v279
      %v291 = vpack.c.b16 %v282, %v281
      %vm301 = vcmask 130048
      %v303 = vsel %vm301, %v236, 0
      %v306 = vsel %vm301, %v238, 0
      %v309 = vsel %vm301, %v240, 0
      %v312 = vsel %vm301, %v242, 0
      %314 = vmatprep.subr.bf16.mxu0 0
      %315 = vmatpush1.bf16.msra.mxu0 %v283
      %316 = vmatprep.subr.bf16.mxu0 0
      %317 = vmatpush1.bf16.msra.mxu0 %v284
      %318 = vmatprep.subr.bf16.mxu0 0
      %319 = vmatpush1.bf16.msra.mxu0 %v285
      %320 = vmatprep.subr.bf16.mxu0 0
      %321 = vmatpush1.bf16.msra.mxu0 %v286
      %322 = vmatprep.subr.bf16.mxu0 0
      %323 = vmatpush1.bf16.msra.mxu0 %v287
      %324 = vmatprep.subr.bf16.mxu0 0
      %325 = vmatpush1.bf16.msra.mxu0 %v288
      %326 = vmatprep.subr.bf16.mxu0 0
      %327 = vmatpush1.bf16.msra.mxu0 %v289
      %328 = vmatprep.subr.bf16.mxu0 0
      %329 = vmatpush1.bf16.msra.mxu0 %v290
      %330 = vmatprep.subr.bf16.mxu0 0
      %331 = vmatpush1.bf16.msra.mxu0 %v291
      %332 = vmatprep.subr.bf16.mxu0 0
      %333 = vmatpush1.bf16.msra.mxu0 0
      %334 = vmatprep.subr.bf16.mxu0 0
      %335 = vmatpush1.bf16.msra.mxu0 0
      %336 = vmatprep.subr.bf16.mxu0 0
      %337 = vmatpush1.bf16.msra.mxu0 0
      %338 = vmatprep.subr.bf16.mxu0 0
      %339 = vmatpush1.bf16.msra.mxu0 0
      %340 = vmatprep.subr.bf16.mxu0 0
      %341 = vmatpush1.bf16.msra.mxu0 0
      %342 = vmatprep.subr.bf16.mxu0 0
      %343 = vmatpush1.bf16.msra.mxu0 0
      %344 = vmatprep.subr.bf16.mxu0 0
      %345 = vmatpush1.bf16.msra.mxu0 0
      %346 = vmatprep.mubr.bf16.mxu0 %v303
      %347 = vmatmul.mubr.bf16.gmra.mrb[0].mxu0 %v235
      %v348 = vpop.f32.mrb[0].mxu0
      %v349 = vadd.f32 %v209, %v348
      %v350 = vpop.f32.mrb[0].mxu0
      %v351 = vpop.f32.mrb[0].mxu0
      %v352 = vadd.f32 %v209, %v351
      %v353 = vpop.f32.mrb[0].mxu0
      %354 = vmatprep.mubr.bf16.mxu0 %v306
      %355 = vmatmul.mubr.bf16.gmra.mrb[0].mxu0 %v237
      %v356 = vpop.f32.mrb[0].mxu0
      %v357 = vadd.f32 %v209, %v356
      %v358 = vpop.f32.mrb[0].mxu0
      %v359 = vpop.f32.mrb[0].mxu0
      %v360 = vadd.f32 %v209, %v359
      %v361 = vpop.f32.mrb[0].mxu0
      %362 = vmatprep.mubr.bf16.mxu0 %v309
      %363 = vmatmul.mubr.bf16.gmra.mrb[0].mxu0 %v239
      %v364 = vpop.f32.mrb[0].mxu0
      %v365 = vadd.f32 %v209, %v364
      %v366 = vpop.f32.mrb[0].mxu0
      %v367 = vpop.f32.mrb[0].mxu0
      %v368 = vadd.f32 %v209, %v367
      %v369 = vpop.f32.mrb[0].mxu0
      %370 = vmatprep.mubr.bf16.mxu0 %v312
      %371 = vmatmul.mubr.bf16.gmra.mrb[0].mxu0 %v241
      %v372 = vpop.f32.mrb[0].mxu0
      %v373 = vadd.f32 %v209, %v372
      %v374 = vpop.f32.mrb[0].mxu0
      %v375 = vpop.f32.mrb[0].mxu0
      %v376 = vadd.f32 %v209, %v375
      %v377 = vpop.f32.mrb[0].mxu0
      %378 = vdwg.mxu0
      %v379 = vsub.f32 0.0, %v349
      %v380 = vsub.f32 0.0, %v352
      %v381 = vsub.f32 0.0, %v357
      %v382 = vsub.f32 0.0, %v360
      %v383 = vsub.f32 0.0, %v365
      %v384 = vsub.f32 0.0, %v368
      %v385 = vsub.f32 0.0, %v373
      %v386 = vsub.f32 0.0, %v376
      %v387 = vmul.f32 %v379, 1.442695
      %v388 = vpow.pop %v387
      %v389 = vmul.f32 %v380, 1.442695
      %v390 = vpow.pop %v389
      %v391 = vmul.f32 %v381, 1.442695
      %v392 = vpow.pop %v391
      %v393 = vmul.f32 %v382, 1.442695
      %v394 = vpow.pop %v393
      %v395 = vmul.f32 %v383, 1.442695
      %v396 = vpow.pop %v395
      %v397 = vmul.f32 %v384, 1.442695
      %v398 = vpow.pop %v397
      %v399 = vmul.f32 %v385, 1.442695
      %v400 = vpow.pop %v399
      %v401 = vmul.f32 %v386, 1.442695
      %v402 = vpow.pop %v401
      %v403 = vadd.f32 %v388, 1.0
      %v404 = vadd.f32 %v390, 1.0
      %v405 = vadd.f32 %v392, 1.0
      %v406 = vadd.f32 %v394, 1.0
      %v407 = vadd.f32 %v396, 1.0
      %v408 = vadd.f32 %v398, 1.0
      %v409 = vadd.f32 %v400, 1.0
      %v410 = vadd.f32 %v402, 1.0
      %v411 = vrcp.pop %v403
      %v412 = vrcp.pop %v404
      %v413 = vrcp.pop %v405
      %v414 = vrcp.pop %v406
      %v415 = vrcp.pop %v407
      %v416 = vrcp.pop %v408
      %v417 = vrcp.pop %v409
      %v418 = vrcp.pop %v410
      %v419 = vmul.f32 %v349, %v411
      %v420 = vmul.f32 %v352, %v412
      %v421 = vmul.f32 %v357, %v413
      %v422 = vmul.f32 %v360, %v414
      %v423 = vmul.f32 %v365, %v415
      %v424 = vmul.f32 %v368, %v416
      %v425 = vmul.f32 %v373, %v417
      %v426 = vmul.f32 %v376, %v418
      %v427 = vpack.c.bf16 %v420, %v419
      %v428 = vpack.c.bf16 %v422, %v421
      %v429 = vpack.c.bf16 %v424, %v423
      %v430 = vpack.c.bf16 %v426, %v425
      %v435 = vunpack.c.l.b16 %v427
      %v436 = vunpack.c.h.b16 %v427
      %v437 = vunpack.c.l.b16 %v428
      %v438 = vunpack.c.h.b16 %v428
      %v439 = vunpack.c.l.b16 %v429
      %v440 = vunpack.c.h.b16 %v429
      %v441 = vunpack.c.l.b16 %v430
      %v442 = vunpack.c.h.b16 %v430
      %v443 = vpack.c.b16 %v435, %v435
      %v444 = vpack.c.b16 %v436, %v436
      %v445 = vpack.c.b16 %v437, %v437
      %v446 = vpack.c.b16 %v438, %v438
      %v447 = vpack.c.b16 %v439, %v439
      %v448 = vpack.c.b16 %v440, %v440
      %v449 = vpack.c.b16 %v441, %v441
      %v450 = vpack.c.b16 %v442, %v442
      %vm459 = vcmask 60416
      %460 = vst.msk [vmem:[%s175] sm:$0xf] %vm459, %v443
      %461 = vst.msk [vmem:[%s175 + $0x4] sm:$0xf] %vm459, %v444
      %462 = vst.msk [vmem:[%s175 + $0x8] sm:$0xf] %vm459, %v445
      %463 = vst.msk [vmem:[%s175 + $0xc] sm:$0xf] %vm459, %v446
      %464 = vst.msk [vmem:[%s175 + $0x10] sm:$0xf] %vm459, %v447
      %465 = vst.msk [vmem:[%s175 + $0x14] sm:$0xf] %vm459, %v448
      %466 = vst.msk [vmem:[%s175 + $0x18] sm:$0xf] %vm459, %v449
      %467 = vst.msk [vmem:[%s175 + $0x1c] sm:$0xf] %vm459, %v450
      %s468 = smul.u32 8, %s14
      %p469 = scmp.lt.s32.totalorder %s468, 15
      %s470 = scalar_select %p469, %s468, 15
      %s471 = smul.addr %s470, 4
      %s472 = scalar_lea.vmem %s3, %s471
      // Predicated region
      $region33: #{focus_pointsize_forward.2} parent=31 // pred_check
        %p473 = pneg %p100
      $region34: #{focus_pointsize_forward.2} parent=31 // pred_check_branch
        %475 = sbr.rel (%p473) target = $region36
      $region35: #{focus_pointsize_forward.2} parent=31 // pred_region
        %s476 = smul.u32 8, %s14
      $region36: #{focus_pointsize_forward.2} parent=31 // pred_fallthru
        _
    $region32: #{focus_pointsize_forward.2} parent=5 // pred_fallthru
      _
    %p477 = scmp.le.s32.totalorder 2, %s9
    // Predicated region
    $region37: #{focus_pointsize_forward.2} parent=5 // pred_check
      %p478 = pneg %p477
    $region38: #{focus_pointsize_forward.2} parent=5 // pred_check_branch
      %480 = sbr.rel (%p478) target = $region40
    $region39: #{focus_pointsize_forward.2} parent=5 // pred_region
      %s481 = ssub.s32 %s9, 2
      // Predicated region
      $region41: #{focus_pointsize_forward.2} parent=39 // pred_check
        %p482 = pneg %p106
      $region42: #{focus_pointsize_forward.2} parent=39 // pred_check_branch
        %484 = sbr.rel (%p482) target = $region44
      $region43: #{focus_pointsize_forward.2} parent=39 // pred_region
        %s485 = smul.u32 8, %s15
        %p486 = scmp.lt.s32.totalorder %s485, 15
        %s487 = scalar_select %p486, %s485, 15
        %s488 = smul.addr %s487, 4
        %s489 = scalar_lea.vmem %s3, %s488
      $region44: #{focus_pointsize_forward.2} parent=39 // pred_fallthru
        _
    $region40: #{focus_pointsize_forward.2} parent=5 // pred_fallthru
      _
  $region6: #{focus_pointsize_forward.2} parent=0 // loop_footer
    %s13 = sadd.s32 1, %s9
  $region7: #{focus_pointsize_forward.2} parent=0 // loop_footer_branch
    %8 = sbr.rel target = $region3
  $region8: #{focus_pointsize_forward.2} parent=0 // loop_exit
    _

// kernel: focus_pointsize_forward.3
$region0: #{focus_pointsize_forward.3}
  #allocation0 [shape = 'u32[]', space=smem, size = 0x4, offset = 0x4, fixed_abs, tag = 'smem constant byte address 0x4 - core index']
  #allocation1 [shape = 'u32[144,128]{1,0:T(1,128)}', space=vmem, size = 0x12000, scoped, tag = 'internal scratch']
  %s0 = inlined_call_operand.vmem [shape: bf16[32,80], index: 0, kind: input, shape index: {}]
  %s1 = inlined_call_operand.vmem [shape: bf16[80,16], index: 1, kind: input, shape index: {}]
  %s2 = inlined_call_operand.vmem [shape: f32[1,16], index: 2, kind: input, shape index: {}]
  %s3 = inlined_call_operand.hbm [shape: f32[32,16], index: 3, kind: output, shape index: {}]
  %s4 = sld [smem:[#allocation0]]
  $region45: #{focus_pointsize_forward.3} parent=0
    _
  %s6 = ssub.s32 1, %s4
  %s7 = scalar_select 0, %s6, %s4
  $region1: #{focus_pointsize_forward.3} parent=0
    #allocation2 [shape = 'u8[16384]{0}', space=vmem, size = 0x4000, scoped, tag = 'output window, operand 0']
    #allocation3 [shape = 's32[2]{0}', space=sflag, size = 0x8, scoped, tag = 'scoped memory for focus_pointsize_forward.3']
    %8 = vsyncpa [#allocation3], 0
    %s9 = scalar_lea.sflag [#allocation3], 1
    %10 = vsyncpa %s9, 0
    loop: start=0, step=1, limit=4
    $region2: #{focus_pointsize_forward.3} parent=1 // loop_pre_header
      _
    $region3: #{focus_pointsize_forward.3} parent=1 // loop_header
      %s12 = sphi 0, %s16
      %p13 = scmp.ge.s32.totalorder %s12, 4
      %s22 = sphi 0, %s24
      %s25 = sphi 0, %s22
      %s26 = sphi 0, %s25
      %s42 = sphi 0, %s26
      %s46 = sphi 0, %s46
      %s48 = sphi 0, %s46
      %s49 = sphi 0, %s48
      %s63 = sphi 0, %s49
      %s67 = sphi 0, %s67
      %s69 = sphi 0, %s67
      %s70 = sphi 0, %s69
      %s84 = sphi 0, %s70
      %s90 = sphi 0, %s92
      %s93 = sphi 0, %s90
      %s94 = sphi 0, %s93
      %s110 = sphi 0, %s94
    $region4: #{focus_pointsize_forward.3} parent=1 // loop_header_branch
      %15 = sbr.rel (%p13) target = $region8
    $region5: #{focus_pointsize_forward.3} parent=1 // loop_body
      %s17 = ssub.s32 %s12, 1
      %s18 = ssub.s32 %s12, 2
      %s19 = sadd.s32 %s12, 1
      %s20 = ssub.s32 %s12, %s19
      %p21 = scmp.eq.s32.totalorder %s20, 0
      %s23 = sadd.s32 %s22, 1
      %s24 = scalar_select %p21, %s22, %s23
      %p27 = pneg %p21
      %p28 = scmp.eq.s32.totalorder %s12, 1
      %p29 = por %p27, %p28
      %p30 = scmp.ne.s32.totalorder %s22, %s25
      %p31 = scmp.eq.s32.totalorder %s12, 0
      %p32 = por %p30, %p31
      %p33 = scmp.ne.s32.totalorder %s22, %s25
      %p34 = scmp.eq.s32.totalorder %s17, 1
      %p35 = por %p33, %p34
      %p36 = scmp.ne.s32.totalorder %s25, %s26
      %p37 = scmp.eq.s32.totalorder %s17, 0
      %p38 = por %p36, %p37
      %p39 = scmp.ne.s32.totalorder %s25, %s26
      %p40 = scmp.eq.s32.totalorder %s18, 1
      %p41 = por %p39, %p40
      %p43 = scmp.ne.s32.totalorder %s26, %s42
      %p44 = scmp.eq.s32.totalorder %s18, 0
      %p45 = por %p43, %p44
      %s47 = sadd.s32 %s46, 1
      %p50 = scmp.eq.s32.totalorder %s12, 1
      %p51 = scmp.ne.s32.totalorder %s46, %s48
      %p52 = scmp.eq.s32.totalorder %s12, 0
      %p53 = por %p51, %p52
      %p54 = scmp.ne.s32.totalorder %s46, %s48
      %p55 = scmp.eq.s32.totalorder %s17, 1
      %p56 = por %p54, %p55
      %p57 = scmp.ne.s32.totalorder %s48, %s49
      %p58 = scmp.eq.s32.totalorder %s17, 0
      %p59 = por %p57, %p58
      %p60 = scmp.ne.s32.totalorder %s48, %s49
      %p61 = scmp.eq.s32.totalorder %s18, 1
      %p62 = por %p60, %p61
      %p64 = scmp.ne.s32.totalorder %s49, %s63
      %p65 = scmp.eq.s32.totalorder %s18, 0
      %p66 = por %p64, %p65
      %s68 = sadd.s32 %s67, 1
      %p71 = scmp.eq.s32.totalorder %s12, 1
      %p72 = scmp.ne.s32.totalorder %s67, %s69
      %p73 = scmp.eq.s32.totalorder %s12, 0
      %p74 = por %p72, %p73
      %p75 = scmp.ne.s32.totalorder %s67, %s69
      %p76 = scmp.eq.s32.totalorder %s17, 1
      %p77 = por %p75, %p76
      %p78 = scmp.ne.s32.totalorder %s69, %s70
      %p79 = scmp.eq.s32.totalorder %s17, 0
      %p80 = por %p78, %p79
      %p81 = scmp.ne.s32.totalorder %s69, %s70
      %p82 = scmp.eq.s32.totalorder %s18, 1
      %p83 = por %p81, %p82
      %p85 = scmp.ne.s32.totalorder %s70, %s84
      %p86 = scmp.eq.s32.totalorder %s18, 0
      %p87 = por %p85, %p86
      %s88 = ssub.s32 %s12, %s19
      %p89 = scmp.eq.s32.totalorder %s88, 0
      %s91 = sadd.s32 %s90, 1
      %s92 = scalar_select %p89, %s90, %s91
      %p95 = pneg %p89
      %p96 = scmp.eq.s32.totalorder %s12, 1
      %p97 = por %p95, %p96
      %p98 = scmp.ne.s32.totalorder %s90, %s93
      %p99 = scmp.eq.s32.totalorder %s12, 0
      %p100 = por %p98, %p99
      %p101 = scmp.ne.s32.totalorder %s90, %s93
      %p102 = scmp.eq.s32.totalorder %s17, 1
      %p103 = por %p101, %p102
      %p104 = scmp.ne.s32.totalorder %s93, %s94
      %p105 = scmp.eq.s32.totalorder %s17, 0
      %p106 = por %p104, %p105
      %p107 = scmp.ne.s32.totalorder %s93, %s94
      %p108 = scmp.eq.s32.totalorder %s18, 1
      %p109 = por %p107, %p108
      %p111 = scmp.ne.s32.totalorder %s94, %s110
      %p112 = scmp.eq.s32.totalorder %s18, 0
      %p113 = por %p111, %p112
      %p114 = scmp.le.s32.totalorder 1, %s12
      %p115 = scmp.lt.s32.totalorder %s12, 3
      %p116 = pnand %p114, %p115
      %p117 = pneg %p116
      // Predicated region
      $region9: #{focus_pointsize_forward.3} parent=5 // pred_check
        _
      $region10: #{focus_pointsize_forward.3} parent=5 // pred_check_branch
        %119 = sbr.rel (%p116) target = $region12
      $region11: #{focus_pointsize_forward.3} parent=5 // pred_region
        %s120 = ssub.s32 %s12, 1
        // Predicated region
        $region13: #{focus_pointsize_forward.3} parent=11 // pred_check
          %p121 = pneg %p59
        $region14: #{focus_pointsize_forward.3} parent=11 // pred_check_branch
          %123 = sbr.rel (%p121) target = $region16
        $region15: #{focus_pointsize_forward.3} parent=11 // pred_region
          _
        $region16: #{focus_pointsize_forward.3} parent=11 // pred_fallthru
          _
        // Predicated region
        $region17: #{focus_pointsize_forward.3} parent=11 // pred_check
          %p124 = pneg %p80
        $region18: #{focus_pointsize_forward.3} parent=11 // pred_check_branch
          %126 = sbr.rel (%p124) target = $region20
        $region19: #{focus_pointsize_forward.3} parent=11 // pred_region
          _
        $region20: #{focus_pointsize_forward.3} parent=11 // pred_fallthru
          _
      $region12: #{focus_pointsize_forward.3} parent=5 // pred_fallthru
        _
      %p127 = scmp.lt.s32.totalorder %s12, 2
      // Predicated region
      $region21: #{focus_pointsize_forward.3} parent=5 // pred_check
        %p128 = pneg %p127
      $region22: #{focus_pointsize_forward.3} parent=5 // pred_check_branch
        %130 = sbr.rel (%p128) target = $region24
      $region23: #{focus_pointsize_forward.3} parent=5 // pred_region
        // Predicated region
        $region25: #{focus_pointsize_forward.3} parent=23 // pred_check
          %p131 = pneg %p32
        $region26: #{focus_pointsize_forward.3} parent=23 // pred_check_branch
          %133 = sbr.rel (%p131) target = $region28
        $region27: #{focus_pointsize_forward.3} parent=23 // pred_region
          %s134 = smul.u32 2, %s12
          %p135 = scmp.lt.s32.totalorder %s134, 3
          %s136 = scalar_select %p135, %s134, 3
          %s137 = smul.addr %s136, 4
          %s138 = scalar_lea.vmem %s0, %s137
          %s139 = smul.u32 2, %s12
        $region28: #{focus_pointsize_forward.3} parent=23 // pred_fallthru
          _
      $region24: #{focus_pointsize_forward.3} parent=5 // pred_fallthru
        _
      %p140 = scmp.le.s32.totalorder 1, %s12
      %p141 = scmp.lt.s32.totalorder %s12, 3
      %p142 = pnand %p140, %p141
      %p143 = pneg %p142
      // Predicated region
      $region29: #{focus_pointsize_forward.3} parent=5 // pred_check
        _
      $region30: #{focus_pointsize_forward.3} parent=5 // pred_check_branch
        %145 = sbr.rel (%p142) target = $region32
      $region31: #{focus_pointsize_forward.3} parent=5 // pred_region
        %s146 = ssub.s32 %s12, 1
        %s147 = smul.u32 2, %s17
        %p148 = scmp.lt.s32.totalorder %s147, 3
        %s149 = scalar_select %p148, %s147, 3
        %s150 = smul.addr %s149, 4
        %s151 = scalar_lea.vmem %s0, %s150
        %p152 = pneg %p38
        %p153 = pneg %p35
        %p154 = pneg %p59
        %p155 = pneg %p56
        %p156 = pneg %p80
        %p157 = pneg %p77
        %p158 = pneg %p106
        %p159 = pneg %p103
        %s160 = sand.u32 %s93, 1
        %s161 = scalar_lea.sflag [#allocation3], %s160
        %s162 = sand.u32 %s93, 1
        %s163 = smul.addr %s162, 16
        %s164 = scalar_lea.vmem [#allocation2], %s163
        %s165 = smul.u32 2, %s17
        %p166 = scmp.lt.s32.totalorder %s165, 3
        %s167 = scalar_select %p166, %s165, 3
        %s168 = smul.addr %s167, 4
        %s169 = scalar_lea.vmem %s0, %s168
        %s170 = smul.u32 2, %s17
        %s171 = smul.u32 2, %s17
        %v173 = vld [vmem:[%s169] sm:$0xf]
        %v174 = vld [vmem:[%s169 + $0x4] sm:$0xf]
        %v175 = vld [vmem:[%s1] sm:$0xf]
        %v176 = vld [vmem:[%s1 + $0x4] sm:$0xf]
        %v177 = vld [vmem:[%s1 + $0x8] sm:$0xf]
        %v178 = vld [vmem:[%s1 + $0xc] sm:$0xf]
        %v179 = vld [vmem:[%s1 + $0x10] sm:$0xf]
        %v180 = vld [vmem:[%s1 + $0x14] sm:$0xf]
        %v181 = vld [vmem:[%s1 + $0x18] sm:$0xf]
        %v182 = vld [vmem:[%s1 + $0x1c] sm:$0xf]
        %v183 = vld [vmem:[%s1 + $0x20] sm:$0xf]
        %v184 = vld [vmem:[%s1 + $0x24] sm:$0xf]
        %v185 = vld [vmem:[%s2] sm:$0x1]
        %v187 = vlaneseq
        %v188 = vshrl.u32 %v187, 7
        %v189 = vsub.s32 0, %v188
        %v190 = vrot.slane %v185, %v189
        %v194 = vunpack.c.l.b16 %v173
        %v195 = vunpack.c.l.b16 %v174
        %v196 = vpack.c.b16 %v195, %v194
        %v207 = vunpack.c.l.b16 %v175
        %v208 = vunpack.c.l.b16 %v176
        %v209 = vunpack.c.l.b16 %v177
        %v210 = vunpack.c.l.b16 %v178
        %v211 = vunpack.c.l.b16 %v179
        %v212 = vunpack.c.l.b16 %v180
        %v213 = vunpack.c.l.b16 %v181
        %v214 = vunpack.c.l.b16 %v182
        %v215 = vunpack.c.l.b16 %v183
        %v216 = vunpack.c.l.b16 %v184
        %v217 = vpack.c.b16 %v208, %v207
        %v218 = vpack.c.b16 %v210, %v209
        %v219 = vpack.c.b16 %v212, %v211
        %v220 = vpack.c.b16 %v214, %v213
        %v221 = vpack.c.b16 %v216, %v215
        %vm227 = vcmask 654336
        %v229 = vsel %vm227, %v196, 0
        %231 = vmatprep.subr.bf16.mxu0 0
        %232 = vmatpush1.bf16.msra.mxu0 %v217
        %233 = vmatprep.subr.bf16.mxu0 0
        %234 = vmatpush1.bf16.msra.mxu0 %v218
        %235 = vmatprep.subr.bf16.mxu0 0
        %236 = vmatpush1.bf16.msra.mxu0 %v219
        %237 = vmatprep.subr.bf16.mxu0 0
        %238 = vmatpush1.bf16.msra.mxu0 %v220
        %239 = vmatprep.subr.bf16.mxu0 0
        %240 = vmatpush1.bf16.msra.mxu0 %v221
        %241 = vmatprep.subr.bf16.mxu0 0
        %242 = vmatpush1.bf16.msra.mxu0 0
        %243 = vmatprep.subr.bf16.mxu0 0
        %244 = vmatpush1.bf16.msra.mxu0 0
        %245 = vmatprep.subr.bf16.mxu0 0
        %246 = vmatpush1.bf16.msra.mxu0 0
        %247 = vmatprep.subr.bf16.mxu0 0
        %248 = vmatpush1.bf16.msra.mxu0 0
        %249 = vmatprep.subr.bf16.mxu0 0
        %250 = vmatpush1.bf16.msra.mxu0 0
        %251 = vmatprep.subr.bf16.mxu0 0
        %252 = vmatpush1.bf16.msra.mxu0 0
        %253 = vmatprep.subr.bf16.mxu0 0
        %254 = vmatpush1.bf16.msra.mxu0 0
        %255 = vmatprep.subr.bf16.mxu0 0
        %256 = vmatpush1.bf16.msra.mxu0 0
        %257 = vmatprep.subr.bf16.mxu0 0
        %258 = vmatpush1.bf16.msra.mxu0 0
        %259 = vmatprep.subr.bf16.mxu0 0
        %260 = vmatpush1.bf16.msra.mxu0 0
        %261 = vmatprep.subr.bf16.mxu0 0
        %262 = vmatpush1.bf16.msra.mxu0 0
        %263 = vmatprep.mubr.bf16.mxu0 0
        %264 = vmatmul.mubr.bf16.gmra.mrb[0].mxu0 %v229
        %v265 = vpop.f32.mrb[0].mxu0
        %v266 = vadd.f32 %v190, %v265
        %v267 = vpop.f32.mrb[0].mxu0
        %v268 = vpop.f32.mrb[0].mxu0
        %v269 = vadd.f32 %v190, %v268
        %v270 = vpop.f32.mrb[0].mxu0
        %271 = vdwg.mxu0
        %v272 = vsub.f32 0.0, %v266
        %v273 = vsub.f32 0.0, %v269
        %v274 = vmul.f32 %v272, 1.442695
        %v275 = vpow.pop %v274
        %v276 = vmul.f32 %v273, 1.442695
        %v277 = vpow.pop %v276
        %v278 = vadd.f32 %v275, 1.0
        %v279 = vadd.f32 %v277, 1.0
        %v280 = vrcp.pop %v278
        %v281 = vrcp.pop %v279
        %v282 = vmul.f32 %v266, %v280
        %v283 = vmul.f32 %v269, %v281
        %vm284 = vcmask 130048
        %285 = vst.msk [vmem:[%s164] sm:$0xff] %vm284, %v282
        %286 = vst.msk [vmem:[%s164 + $0x8] sm:$0xff] %vm284, %v283
        %s287 = sand.u32 %s93, 1
        %s288 = scalar_lea.sflag [#allocation3], %s287
        %s289 = sand.u32 %s93, 1
        %s290 = smul.addr %s289, 16
        %s291 = scalar_lea.vmem [#allocation2], %s290
        // Predicated region
        $region33: #{focus_pointsize_forward.3} parent=31 // pred_check
          %p292 = pneg %p103
        $region34: #{focus_pointsize_forward.3} parent=31 // pred_check_branch
          %294 = sbr.rel (%p292) target = $region36
        $region35: #{focus_pointsize_forward.3} parent=31 // pred_region
          %s295 = smul.u32 2, %s17
          %s297 = ssub.s32 256, 256
          %298 = vsyncadd %s288, %s297
          %s299 = smul.addr %s295, 128
          %s300 = scalar_lea.hbm %s3, %s299
          %s301 = sshll.u32 %s291, 4
          %s302 = int_to_ptr.vmem [resolvable:$true] %s301
          %307 = dma.vmem_to_hbm [thread:$0]  %s302, 256, %s300, %s288, 128, 128, 8
        $region36: #{focus_pointsize_forward.3} parent=31 // pred_fallthru
          _
      $region32: #{focus_pointsize_forward.3} parent=5 // pred_fallthru
        _
      %p308 = scmp.le.s32.totalorder 2, %s12
      // Predicated region
      $region37: #{focus_pointsize_forward.3} parent=5 // pred_check
        %p309 = pneg %p308
      $region38: #{focus_pointsize_forward.3} parent=5 // pred_check_branch
        %311 = sbr.rel (%p309) target = $region40
      $region39: #{focus_pointsize_forward.3} parent=5 // pred_region
        %s312 = ssub.s32 %s12, 2
        // Predicated region
        $region41: #{focus_pointsize_forward.3} parent=39 // pred_check
          %p313 = pneg %p109
        $region42: #{focus_pointsize_forward.3} parent=39 // pred_check_branch
          %315 = sbr.rel (%p313) target = $region44
        $region43: #{focus_pointsize_forward.3} parent=39 // pred_region
          %s316 = sand.u32 %s94, 1
          %s317 = scalar_lea.sflag [#allocation3], %s316
          %s318 = sand.u32 %s94, 1
          %s319 = smul.addr %s318, 16
          %s320 = scalar_lea.vmem [#allocation2], %s319
          %321 = dma.done %s317, 256
        $region44: #{focus_pointsize_forward.3} parent=39 // pred_fallthru
          _
      $region40: #{focus_pointsize_forward.3} parent=5 // pred_fallthru
        _
    $region6: #{focus_pointsize_forward.3} parent=1 // loop_footer
      %s16 = sadd.s32 1, %s12
    $region7: #{focus_pointsize_forward.3} parent=1 // loop_footer_branch
      %11 = sbr.rel target = $region3
    $region8: #{focus_pointsize_forward.3} parent=1 // loop_exit
      _
    %322 = vsyncpa [#allocation3], 1
    %s323 = scalar_lea.sflag [#allocation3], 1
    %324 = vsyncpa %s323, 1

</llo_original>
